<compile_context>
chip_gen: v5e
topology: v5e:2x2
jax: 0.10.0
libtpu: 0.0.40
codegen_flags: <defaults>
</compile_context>

<pallas_src>
import jax
import jax.numpy as jnp
import numpy as np
from jax.experimental import pallas as pl
from jax.experimental.pallas import tpu as pltpu


def _round_up(x, m):
    return ((x + m - 1) // m) * m


def _make_gmf_kernel(apply_sigmoid: bool, num_features: int):
    F = num_features

    def kernel(x_ref, wf_ref, bf_ref, bd_ref, out_ref):
        # x_ref : (TB, Ku+Ki)  streamed activations (f32 or bf16)
        # wf_ref: (Ku+Ki, 2F)  resident block-diagonal fused weight (f32 or bf16)
        # bf_ref: (1, 2F)      resident fused bias (f32)
        # bd_ref: (1, 1)       resident decoder bias (f32)
        # out_ref:(TB, 1)      f32
        e = jnp.dot(x_ref[...], wf_ref[...],
                    preferred_element_type=jnp.float32) + bf_ref[...]
        e_u = e[:, :F]            # user embedding
        e_i = e[:, F:]            # item embedding with decoder column pre-folded
        p = e_u * e_i             # GMF elementwise interaction (VPU, f32)
        x = jnp.sum(p, axis=1, keepdims=True) + bd_ref[...]   # decoder (lane reduce)
        if apply_sigmoid:
            x = jax.nn.sigmoid(x)
        out_ref[...] = x.astype(out_ref.dtype)

    return kernel


def gmf_neucf_forward(params, user, item, methods="regression",
                      batch_tile=1024, mxu_dtype=jnp.bfloat16):
    """Pallas forward pass of gmf_neucf_model, gridded over the batch dim."""
    B, n_user = user.shape
    n_item = item.shape[1]
    F = params["W_user"].shape[1]
    Kc = n_user + n_item

    # Fold decoder weight column into the item-embedding linear:
    #   decoder(e_u * e_i) = sum_f e_u[:, f] * (Wd[f, 0] * e_i[:, f]) + bd
    d_row = params["Wd"].reshape(1, F)                 # (1, F)
    W_item_fold = params["W_item"] * d_row             # (n_item, F)
    b_item_fold = params["b_item"] * d_row             # (1, F)

    # Fused block-diagonal weight: [user | item] @ Wf == [e_u_pre | e_i_pre]
    Wf = jnp.zeros((Kc, 2 * F), jnp.float32)
    Wf = Wf.at[:n_user, :F].set(params["W_user"])
    Wf = Wf.at[n_user:, F:].set(W_item_fold)
    bf = jnp.concatenate([params["b_user"], b_item_fold], axis=1)   # (1, 2F)
    bd = params["bd"]                                               # (1, 1)

    x_cat = jnp.concatenate([user, item], axis=1)                   # (B, Kc)

    if mxu_dtype is not None:
        x_cat = x_cat.astype(mxu_dtype)
        Wf = Wf.astype(mxu_dtype)

    # Batch tiling / padding (tile rows must be a multiple of 8).
    TB = max(8, min(int(batch_tile), _round_up(B, 8)))
    B_pad = _round_up(B, TB)
    if B_pad != B:
        x_cat = jnp.pad(x_cat, ((0, B_pad - B), (0, 0)))
    grid = (B_pad // TB,)

    kernel = _make_gmf_kernel(methods != "regression", F)

    out = pl.pallas_call(
        kernel,
        out_shape=jax.ShapeDtypeStruct((B_pad, 1), jnp.float32),
        grid=grid,
        in_specs=[
            pl.BlockSpec((TB, Kc), lambda i: (i, 0)),       # streamed activations
            pl.BlockSpec((Kc, 2 * F), lambda i: (0, 0)),    # resident fused weight
            pl.BlockSpec((1, 2 * F), lambda i: (0, 0)),     # resident fused bias
            pl.BlockSpec((1, 1), lambda i: (0, 0)),         # resident decoder bias
        ],
        out_specs=pl.BlockSpec((TB, 1), lambda i: (i, 0)),
        compiler_params=pltpu.CompilerParams(
            dimension_semantics=("parallel",)),
    )(x_cat, Wf, bf, bd)
    return out[:B]


def init_params(key, num_user, num_item, num_features):
    """Mirror PyTorch nn.Linear default init (uniform +-1/sqrt(fan_in)).
    Weights are stored pre-transposed as (in, out)."""
    ks = jax.random.split(key, 6)

    def lin(kw, kb, fan_in, fan_out):
        bound = 1.0 / np.sqrt(fan_in)
        W = jax.random.uniform(kw, (fan_in, fan_out), jnp.float32, -bound, bound)
        b = jax.random.uniform(kb, (1, fan_out), jnp.float32, -bound, bound)
        return W, b

    W_user, b_user = lin(ks[0], ks[1], num_user, num_features)
    W_item, b_item = lin(ks[2], ks[3], num_item, num_features)
    Wd, bd = lin(ks[4], ks[5], num_features, 1)
    return dict(W_user=W_user, b_user=b_user, W_item=W_item, b_item=b_item,
                Wd=Wd, bd=bd)


def reference_forward(params, user, item, methods):
    """Pure-JAX reference exactly mirroring the PyTorch forward (all f32)."""
    e_u = user @ params["W_user"] + params["b_user"]
    e_i = item @ params["W_item"] + params["b_item"]
    x = (e_u * e_i) @ params["Wd"] + params["bd"]
    return x if methods == "regression" else jax.nn.sigmoid(x)


if __name__ == "__main__":
    num_user, num_item, num_features = 16, 24, 32

    key = jax.random.PRNGKey(0)
    kp = jax.random.fold_in(key, 0)
    params = init_params(kp, num_user, num_item, num_features)

    # case 1: small batch, single tile, f32 MXU path  -> tight match vs reference
    # case 2: batch needing padding + multi-tile grid, bf16 MXU path -> loose match
    cases = [
        dict(B=8, batch_tile=1024, mxu_dtype=jnp.float32, atol=1e-5, rtol=1e-5),
        dict(B=300, batch_tile=128, mxu_dtype=jnp.bfloat16, atol=5e-2, rtol=5e-2),
    ]

    ok = True
    for c in cases:
        kub, kib = jax.random.split(jax.random.fold_in(key, c["B"]), 2)
        user = jax.random.normal(kub, (c["B"], num_user), jnp.float32)
        item = jax.random.normal(kib, (c["B"], num_item), jnp.float32)
        for methods in ("regression", "classification"):
            out = gmf_neucf_forward(params, user, item, methods=methods,
                                    batch_tile=c["batch_tile"],
                                    mxu_dtype=c["mxu_dtype"])
            out = jax.block_until_ready(out)
            ref = reference_forward(params, user, item, methods)
            if out.shape != ref.shape or not np.allclose(
                    np.asarray(out), np.asarray(ref),
                    atol=c["atol"], rtol=c["rtol"]):
                ok = False
                err = np.max(np.abs(np.asarray(out) - np.asarray(ref)))
                print(f"MISMATCH B={c['B']} methods={methods} max_err={err}")

    if ok:
        print("KERNEL_OK")
</pallas_src>

<mosaic_0001>
module attributes {stable_mosaic.version = 11 : i64} {
  func.func @kernel(%arg0: i32, %arg1: memref<8x40xf32, #tpu.memory_space<vmem>>, %arg2: memref<40x64xf32, #tpu.memory_space<vmem>>, %arg3: memref<1x64xf32, #tpu.memory_space<vmem>>, %arg4: memref<1x1xf32, #tpu.memory_space<vmem>>, %arg5: memref<8x1xf32, #tpu.memory_space<vmem>>) attributes {dimension_semantics = [#tpu.dimension_semantics<parallel>], iteration_bounds = array<i64: 1>, scalar_prefetch = 0 : i64, scratch_operands = 0 : i64, tpu.core_type = #tpu.core_type<tc>, window_params = [{transform_indices = @transform_0, window_bounds = array<i64: 8, 40>}, {pipeline_mode = #tpu.pipeline_mode<synchronous>, transform_indices = @transform_1, window_bounds = array<i64: 40, 64>}, {pipeline_mode = #tpu.pipeline_mode<synchronous>, transform_indices = @transform_2, window_bounds = array<i64: 1, 64>}, {pipeline_mode = #tpu.pipeline_mode<synchronous>, transform_indices = @transform_3, window_bounds = array<i64: 1, 1>}, {transform_indices = @transform_4, window_bounds = array<i64: 8, 1>}]} {
    %c0 = arith.constant 0 : index
    %c0_0 = arith.constant 0 : index
    %0 = vector.load %arg1[%c0, %c0_0] : memref<8x40xf32, #tpu.memory_space<vmem>>, vector<8x40xf32>
    %c0_1 = arith.constant 0 : index
    %c0_2 = arith.constant 0 : index
    %1 = vector.load %arg2[%c0_1, %c0_2] : memref<40x64xf32, #tpu.memory_space<vmem>>, vector<40x64xf32>
    %cst = arith.constant dense<0.000000e+00> : vector<8x64xf32>
    %2 = tpu.matmul %0, %1, %cst {dimension_numbers = #tpu.dot_dimension_numbers<[1], [0], [0], [1], [0, 0, 1, 1], [], []>} : vector<8x40xf32>, vector<40x64xf32>, vector<8x64xf32> -> vector<8x64xf32>
    %c0_3 = arith.constant 0 : index
    %c0_4 = arith.constant 0 : index
    %3 = vector.load %arg3[%c0_3, %c0_4] : memref<1x64xf32, #tpu.memory_space<vmem>>, vector<1x64xf32>
    %4 = vector.broadcast %3 : vector<1x64xf32> to vector<8x64xf32>
    %5 = arith.addf %2, %4 : vector<8x64xf32>
    %6 = vector.extract_strided_slice %5 {offsets = [0, 0], sizes = [8, 32], strides = [1, 1]} : vector<8x64xf32> to vector<8x32xf32>
    %7 = vector.extract_strided_slice %5 {offsets = [0, 32], sizes = [8, 32], strides = [1, 1]} : vector<8x64xf32> to vector<8x32xf32>
    %8 = arith.mulf %6, %7 : vector<8x32xf32>
    %cst_5 = arith.constant dense<0.000000e+00> : vector<8xf32>
    %9 = vector.multi_reduction <add>, %8, %cst_5 [1] : vector<8x32xf32> to vector<8xf32>
    %10 = vector.shape_cast %9 : vector<8xf32> to vector<8x1xf32>
    %c0_6 = arith.constant 0 : index
    %c0_7 = arith.constant 0 : index
    %11 = vector.load %arg4[%c0_6, %c0_7] : memref<1x1xf32, #tpu.memory_space<vmem>>, vector<1x1xf32>
    %12 = vector.broadcast %11 : vector<1x1xf32> to vector<8x1xf32>
    %13 = arith.addf %10, %12 : vector<8x1xf32>
    %c0_8 = arith.constant 0 : index
    %c0_9 = arith.constant 0 : index
    %14 = vector.load %arg5[%c0_8, %c0_9] : memref<8x1xf32, #tpu.memory_space<vmem>>, vector<8x1xf32>
    tpu.vector_store %arg5[%c0_8, %c0_9], %13 {strides = array<i32>} : memref<8x1xf32, #tpu.memory_space<vmem>>, vector<8x1xf32>,
    return
  }
  func.func @transform_0(%arg0: i32) -> (i32, i32) {
    %c0_i32 = arith.constant 0 : i32
    %c0_i32_0 = arith.constant 0 : i32
    return %arg0, %c0_i32 : i32, i32
  }
  func.func @transform_1(%arg0: i32) -> (i32, i32) {
    %c0_i32 = arith.constant 0 : i32
    %c0_i32_0 = arith.constant 0 : i32
    %c0_i32_1 = arith.constant 0 : i32
    return %c0_i32, %c0_i32_0 : i32, i32
  }
  func.func @transform_2(%arg0: i32) -> (i32, i32) {
    %c0_i32 = arith.constant 0 : i32
    %c0_i32_0 = arith.constant 0 : i32
    %c0_i32_1 = arith.constant 0 : i32
    return %c0_i32, %c0_i32_0 : i32, i32
  }
  func.func @transform_3(%arg0: i32) -> (i32, i32) {
    %c0_i32 = arith.constant 0 : i32
    %c0_i32_0 = arith.constant 0 : i32
    %c0_i32_1 = arith.constant 0 : i32
    return %c0_i32, %c0_i32_0 : i32, i32
  }
  func.func @transform_4(%arg0: i32) -> (i32, i32) {
    %c0_i32 = arith.constant 0 : i32
    %c0_i32_0 = arith.constant 0 : i32
    return %arg0, %c0_i32 : i32, i32
  }
}

</mosaic_0001>

<llo_original>
// kernel: tpu_custom_call.1
$region0: #{tpu_custom_call.1}
  #allocation0 [shape = 'u32[]', space=smem, size = 0x4, offset = 0x4, fixed_abs, tag = 'smem constant byte address 0x4 - core index']
  #allocation1 [shape = 'u32[72,128]{1,0:T(1,128)}', space=vmem, size = 0x9000, scoped, tag = 'internal scratch']
  #allocation2 [shape = 'f32[1,1]{1,0:T(1,128)S(1)}', space=vmem, size = 0x200, scoped, tag = 'scoped memory for tpu_custom_call.1']
  %s0 = inlined_call_operand.hbm [shape: f32[8,40], index: 0, kind: input, shape index: {}]
  %s1 = inlined_call_operand.hbm [shape: f32[40,64], index: 1, kind: input, shape index: {}]
  %s2 = inlined_call_operand.vmem [shape: f32[1,64], index: 2, kind: input, shape index: {}]
  %s3 = inlined_call_operand.<no memory space> [shape: f32[1,1], index: 3, kind: input, shape index: {}]
  %s4 = inlined_call_operand.vmem [shape: f32[8,1], index: 4, kind: output, shape index: {}]
  %s5 = sld [smem:[#allocation0]]
  $region34: #{tpu_custom_call.1} parent=0
    _
  %s7 = ssub.s32 1, %s5
  %s8 = scalar_select 0, %s7, %s5
  %v9 = vstv %s3
  %10 = vst [vmem:[#allocation2] sm:$0x1] %v9
  $region1: #{tpu_custom_call.1} parent=0
    #allocation3 [shape = 'u8[4096]{0}', space=vmem, size = 0x1000, scoped, tag = 'input window, operand 0, single buffered']
    #allocation4 [shape = 's32[1]{0}', space=sflag, size = 0x4, scoped, tag = 'scoped memory for tpu_custom_call.1']
    #allocation5 [shape = 'u8[20480]{0}', space=vmem, size = 0x5000, scoped, tag = 'input window, operand 1, single buffered']
    #allocation6 [shape = 's32[1]{0}', space=sflag, size = 0x4, scoped, tag = 'scoped memory for tpu_custom_call.1']
    %11 = vsyncpa [#allocation4], 0
    %12 = vsyncpa [#allocation6], 0
    // Predicated region
    $region2: #{tpu_custom_call.1} parent=1 // pred_check
      _
    $region3: #{tpu_custom_call.1} parent=1 // pred_check_branch
      %14 = sbr.rel (0) target = $region5
    $region4: #{tpu_custom_call.1} parent=1 // pred_region
      %16 = vsyncadd [#allocation4], 0
      %s18 = sshll.u32 %s0, 4
      %s19 = int_to_ptr.hbm [resolvable:$true] %s18
      %s20 = sshll.u32 [#allocation3], 4
      %s21 = int_to_ptr.vmem [resolvable:$true] %s20
      %23 = dma.hbm_to_vmem [thread:$0]  %s19, 128, %s21, [#allocation4]
    $region5: #{tpu_custom_call.1} parent=1 // pred_fallthru
      _
    // Predicated region
    $region6: #{tpu_custom_call.1} parent=1 // pred_check
      _
    $region7: #{tpu_custom_call.1} parent=1 // pred_check_branch
      %25 = sbr.rel (0) target = $region9
    $region8: #{tpu_custom_call.1} parent=1 // pred_region
      %27 = vsyncadd [#allocation6], 0
      %s28 = sshll.u32 %s1, 4
      %s29 = int_to_ptr.hbm [resolvable:$true] %s28
      %s30 = sshll.u32 [#allocation5], 4
      %s31 = int_to_ptr.vmem [resolvable:$true] %s30
      %36 = dma.hbm_to_vmem [thread:$0]  %s29, 640, %s31, [#allocation6], 128, 128, 8
    $region9: #{tpu_custom_call.1} parent=1 // pred_fallthru
      _
    // Predicated region
    $region10: #{tpu_custom_call.1} parent=1 // pred_check
      _
    $region11: #{tpu_custom_call.1} parent=1 // pred_check_branch
      %38 = sbr.rel (0) target = $region13
    $region12: #{tpu_custom_call.1} parent=1 // pred_region
      _
    $region13: #{tpu_custom_call.1} parent=1 // pred_fallthru
      _
    // Predicated region
    $region14: #{tpu_custom_call.1} parent=1 // pred_check
      _
    $region15: #{tpu_custom_call.1} parent=1 // pred_check_branch
      %40 = sbr.rel (0) target = $region17
    $region16: #{tpu_custom_call.1} parent=1 // pred_region
      _
    $region17: #{tpu_custom_call.1} parent=1 // pred_fallthru
      _
    // Predicated region
    $region18: #{tpu_custom_call.1} parent=1 // pred_check
      _
    $region19: #{tpu_custom_call.1} parent=1 // pred_check_branch
      %42 = sbr.rel (0) target = $region21
    $region20: #{tpu_custom_call.1} parent=1 // pred_region
      %44 = dma.done [#allocation4], 128
    $region21: #{tpu_custom_call.1} parent=1 // pred_fallthru
      _
    // Predicated region
    $region22: #{tpu_custom_call.1} parent=1 // pred_check
      _
    $region23: #{tpu_custom_call.1} parent=1 // pred_check_branch
      %46 = sbr.rel (0) target = $region25
    $region24: #{tpu_custom_call.1} parent=1 // pred_region
      %48 = dma.done [#allocation6], 640
    $region25: #{tpu_custom_call.1} parent=1 // pred_fallthru
      _
    %v49 = vld [vmem:[#allocation3] sm:$0xff]
    %v50 = vld [vmem:[#allocation5] sm:$0xff]
    %v51 = vld [vmem:[#allocation5 + $0x8] sm:$0xff]
    %v52 = vld [vmem:[#allocation5 + $0x10] sm:$0xff]
    %v53 = vld [vmem:[#allocation5 + $0x18] sm:$0xff]
    %v54 = vld [vmem:[#allocation5 + $0x20] sm:$0xff]
    %v55 = vld [vmem:[%s2] sm:$0x1]
    %v57 = vperm.slane %v55, 0
    %vm59 = vcmask 326656
    %v61 = vsel %vm59, %v49, 0
    %63 = vmatpush.msra.mxu0 0.0
    %64 = vmatpush.msra.mxu0 0.0
    %65 = vmatpush.msra.mxu0 0.0
    %66 = vmatpush.msra.mxu0 0.0
    %67 = vmatpush.msra.mxu0 0.0
    %68 = vmatpush.msra.mxu0 0.0
    %69 = vmatpush.msra.mxu0 0.0
    %70 = vmatpush.msra.mxu0 0.0
    %71 = vmatpush.msra.mxu0 0.0
    %72 = vmatpush.msra.mxu0 0.0
    %73 = vmatpush.msra.mxu0 0.0
    %74 = vmatpush.msra.mxu0 %v54
    %75 = vmatpush.msra.mxu0 %v53
    %76 = vmatpush.msra.mxu0 %v52
    %77 = vmatpush.msra.mxu0 %v51
    %78 = vmatpush.msra.mxu0 %v50
    %79 = vmatmul.f32.gmra.mxu0 %v61
    %v80 = vpop.f32.mrf.mxu0
    %v81 = vadd.f32 %v57, %v80
    %82 = vdwg.mxu0
    %84 = vrot.lane.b32.xlu0 %v81, 96
    %v85 = vpop.permute.xlu0 %84
    %v87 = vmul.f32 %v81, %v85
    %vm88 = vcmask 261120
    %v89 = vsel %vm88, %v87, 0.0
    %90 = vadd.xlane.f32.xlu0 %v89
    %v91 = vpop.xlane.xlu0 %90
    %v92 = vld [vmem:[#allocation2] sm:$0x1]
    %v94 = vperm.slane %v92, 0
    %v96 = vadd.f32 %v91, %v94
    %vm97 = vcmask 7168
    %98 = vst.msk [vmem:[%s4] sm:$0xff] %vm97, %v96
    // Predicated region
    $region26: #{tpu_custom_call.1} parent=1 // pred_check
      _
    $region27: #{tpu_custom_call.1} parent=1 // pred_check_branch
      %100 = sbr.rel (0) target = $region29
    $region28: #{tpu_custom_call.1} parent=1 // pred_region
      _
    $region29: #{tpu_custom_call.1} parent=1 // pred_fallthru
      _
    // Predicated region
    $region30: #{tpu_custom_call.1} parent=1 // pred_check
      _
    $region31: #{tpu_custom_call.1} parent=1 // pred_check_branch
      %102 = sbr.rel (0) target = $region33
    $region32: #{tpu_custom_call.1} parent=1 // pred_region
      _
    $region33: #{tpu_custom_call.1} parent=1 // pred_fallthru
      _
    %103 = vsyncpa [#allocation4], 1
    %104 = vsyncpa [#allocation6], 1

</llo_original>
